<compile_context>
chip_gen: v7x
topology: tpu7x:2x2x1
jax: 0.10.0
libtpu: 0.0.40
codegen_flags: <defaults>
</compile_context>

<pallas_src>
import jax
import jax.numpy as jnp
from jax.experimental import pallas as pl
from jax.experimental.pallas import tpu as pltpu

MIN_VALUE = 1.144
MAX_VALUE = 1.145

# ReLU6 elision is only valid while [MIN_VALUE, MAX_VALUE] ⊂ [0, 6]; guard it so
# a constant change cannot silently break fidelity with the PyTorch reference.
assert 0.0 <= MIN_VALUE <= MAX_VALUE <= 6.0


def _convt1x1_clamp_kernel(w_ref, b_ref, x_ref, o_ref):
    # w_ref: (C,) f32 SMEM; b_ref: (1,) f32 SMEM
    # x_ref: (1, C, TS, 128) VMEM (native dtype); o_ref: (1, TS, 128) f32 VMEM
    C = x_ref.shape[1]
    # Channel mix as scalar-splat VPU FMAs; bias fused into the first FMA.
    y = x_ref[0, 0].astype(jnp.float32) * w_ref[0] + b_ref[0]
    for c in range(1, C):
        y = y + x_ref[0, c].astype(jnp.float32) * w_ref[c]
    # clamp_min / clamp_max in f32; the subsequent ReLU6 is a no-op (see guard).
    y = jnp.minimum(jnp.maximum(y, MIN_VALUE), MAX_VALUE)
    o_ref[0] = y.astype(o_ref.dtype)


def model_forward(x_nchw, weight, bias, *, spatial_tile=512):
    """x_nchw: (N, C, H, W); weight: (C_in, C_out=1, 1, 1); bias: (C_out=1,).

    Returns (N, 1, H, W) float32 = relu6(clamp(convT_1x1(x), MIN, MAX)).
    """
    N, C, H, W = x_nchw.shape
    O = weight.shape[1]
    assert O == 1 and weight.shape[2] == 1 and weight.shape[3] == 1

    HW = H * W
    # Natural NCHW layout: (N, C, HW) is a pure relabel, no transpose copy.
    x_v = x_nchw.reshape(N, C, HW)

    # Pad lane axis only to a multiple of 128 (usually zero, never 8*128 worth).
    pad = (-HW) % 128
    if pad:
        x_v = jnp.pad(x_v, ((0, 0), (0, 0), (0, pad)))
    HWp = HW + pad
    S = HWp // 128
    x_4d = x_v.reshape(N, C, S, 128)

    # Spatial tiling along the packed sublane axis: full extent when small
    # (valid even if S % 8 != 0), otherwise 8-aligned tiles of `spatial_tile`.
    TS = S if S <= spatial_tile else spatial_tile
    n_s = pl.cdiv(S, TS)

    w = weight.reshape(C).astype(jnp.float32)   # (C,) scalars -> SMEM
    b = bias.reshape(O).astype(jnp.float32)     # (1,)

    out = pl.pallas_call(
        _convt1x1_clamp_kernel,
        out_shape=jax.ShapeDtypeStruct((N, S, 128), jnp.float32),
        grid=(N, n_s),
        in_specs=[
            pl.BlockSpec(memory_space=pltpu.MemorySpace.SMEM),          # weight
            pl.BlockSpec(memory_space=pltpu.MemorySpace.SMEM),          # bias
            pl.BlockSpec((1, C, TS, 128), lambda n, s: (n, 0, s, 0)),   # x tile
        ],
        out_specs=pl.BlockSpec((1, TS, 128), lambda n, s: (n, s, 0)),
        compiler_params=pltpu.CompilerParams(
            dimension_semantics=("parallel", "parallel")),
    )(w, b, x_4d)

    # (N, S, 128) -> (N, HWp) -> (N, HW) -> (N, 1, H, W)
    out = out.reshape(N, HWp)
    if pad:
        out = out[:, :HW]
    return out.reshape(N, 1, H, W)


def _reference(x, weight, bias):
    c_in, c_out = weight.shape[0], weight.shape[1]
    ref = jnp.einsum("nchw,co->nohw", x.astype(jnp.float32),
                     weight.reshape(c_in, c_out).astype(jnp.float32))
    ref = ref + bias.reshape(1, c_out, 1, 1).astype(jnp.float32)
    ref = jnp.minimum(jnp.maximum(ref, MIN_VALUE), MAX_VALUE)
    return jnp.minimum(jnp.maximum(ref, 0.0), 6.0)   # redundant ReLU6, kept for fidelity


if __name__ == "__main__":
    key = jax.random.PRNGKey(0)
    kx, kw, kb, kx2 = jax.random.split(key, 4)

    # Shape implied by the module spec: x1 = torch.randn(1, 3, 32, 32)
    N, C_in, H, W = 1, 3, 32, 32
    C_out = 1

    x1 = jax.random.normal(kx, (N, C_in, H, W), dtype=jnp.float32)
    # ConvTranspose2d weight shape: (in_channels, out_channels, kH, kW)
    weight = jax.random.normal(kw, (C_in, C_out, 1, 1), dtype=jnp.float32) * 0.5
    bias = jax.random.normal(kb, (C_out,), dtype=jnp.float32) * 0.1

    fwd = jax.jit(model_forward)
    out = jax.block_until_ready(fwd(x1, weight, bias))
    ref = _reference(x1, weight, bias)
    assert out.shape == (N, C_out, H, W)
    assert jnp.allclose(out, ref, atol=1e-5, rtol=1e-5)

    # Secondary check: batched input exercising the grid-over-N path (no
    # wrapper transpose needed in the new layout).
    x2 = jax.random.normal(kx2, (2, C_in, 16, 16), dtype=jnp.float32)
    out2 = jax.block_until_ready(jax.jit(model_forward)(x2, weight, bias))
    ref2 = _reference(x2, weight, bias)
    assert out2.shape == (2, C_out, 16, 16)
    assert jnp.allclose(out2, ref2, atol=1e-5, rtol=1e-5)

    print("KERNEL_OK")
</pallas_src>

<mosaic_0001>
module attributes {stable_mosaic.version = 11 : i64} {
  func.func @_convt1x1_clamp_kernel(%arg0: i32, %arg1: i32, %arg2: memref<3xf32, #tpu.memory_space<smem>>, %arg3: memref<1xf32, #tpu.memory_space<smem>>, %arg4: memref<1x3x8x128xf32, #tpu.memory_space<vmem>>, %arg5: memref<1x8x128xf32, #tpu.memory_space<vmem>>) attributes {dimension_semantics = [#tpu.dimension_semantics<parallel>, #tpu.dimension_semantics<parallel>], iteration_bounds = array<i64: 1, 1>, scalar_prefetch = 0 : i64, scratch_operands = 0 : i64, tpu.core_type = #tpu.core_type<tc>, window_params = [{transform_indices = @transform_0, window_bounds = array<i64: 3>}, {transform_indices = @transform_1, window_bounds = array<i64: 1>}, {transform_indices = @transform_2, window_bounds = array<i64: 1, 3, 8, 128>}, {transform_indices = @transform_3, window_bounds = array<i64: 1, 8, 128>}]} {
    %c0 = arith.constant 0 : index
    %c0_0 = arith.constant 0 : index
    %c0_1 = arith.constant 0 : index
    %c0_2 = arith.constant 0 : index
    %0 = vector.load %arg4[%c0, %c0_0, %c0_1, %c0_2] : memref<1x3x8x128xf32, #tpu.memory_space<vmem>>, vector<1x1x8x128xf32>
    %1 = vector.shape_cast %0 : vector<1x1x8x128xf32> to vector<8x128xf32>
    %c0_3 = arith.constant 0 : index
    %2 = memref.load %arg2[%c0_3] : memref<3xf32, #tpu.memory_space<smem>>
    %3 = vector.broadcast %2 : f32 to vector<8x128xf32>
    %4 = arith.mulf %1, %3 : vector<8x128xf32>
    %c0_4 = arith.constant 0 : index
    %5 = memref.load %arg3[%c0_4] : memref<1xf32, #tpu.memory_space<smem>>
    %6 = vector.broadcast %5 : f32 to vector<8x128xf32>
    %7 = arith.addf %4, %6 : vector<8x128xf32>
    %c0_5 = arith.constant 0 : index
    %c1 = arith.constant 1 : index
    %c0_6 = arith.constant 0 : index
    %c0_7 = arith.constant 0 : index
    %8 = vector.load %arg4[%c0_5, %c1, %c0_6, %c0_7] : memref<1x3x8x128xf32, #tpu.memory_space<vmem>>, vector<1x1x8x128xf32>
    %9 = vector.shape_cast %8 : vector<1x1x8x128xf32> to vector<8x128xf32>
    %c1_8 = arith.constant 1 : index
    %10 = memref.load %arg2[%c1_8] : memref<3xf32, #tpu.memory_space<smem>>
    %11 = vector.broadcast %10 : f32 to vector<8x128xf32>
    %12 = arith.mulf %9, %11 : vector<8x128xf32>
    %13 = arith.addf %7, %12 : vector<8x128xf32>
    %c0_9 = arith.constant 0 : index
    %c2 = arith.constant 2 : index
    %c0_10 = arith.constant 0 : index
    %c0_11 = arith.constant 0 : index
    %14 = vector.load %arg4[%c0_9, %c2, %c0_10, %c0_11] : memref<1x3x8x128xf32, #tpu.memory_space<vmem>>, vector<1x1x8x128xf32>
    %15 = vector.shape_cast %14 : vector<1x1x8x128xf32> to vector<8x128xf32>
    %c2_12 = arith.constant 2 : index
    %16 = memref.load %arg2[%c2_12] : memref<3xf32, #tpu.memory_space<smem>>
    %17 = vector.broadcast %16 : f32 to vector<8x128xf32>
    %18 = arith.mulf %15, %17 : vector<8x128xf32>
    %19 = arith.addf %13, %18 : vector<8x128xf32>
    %cst = arith.constant 1.144000e+00 : f32
    %20 = vector.broadcast %cst : f32 to vector<8x128xf32>
    %21 = arith.maximumf %19, %20 : vector<8x128xf32>
    %cst_13 = arith.constant 1.145000e+00 : f32
    %22 = vector.broadcast %cst_13 : f32 to vector<8x128xf32>
    %23 = arith.minimumf %21, %22 : vector<8x128xf32>
    %c0_14 = arith.constant 0 : index
    %c0_15 = arith.constant 0 : index
    %c0_16 = arith.constant 0 : index
    %24 = vector.load %arg5[%c0_14, %c0_15, %c0_16] : memref<1x8x128xf32, #tpu.memory_space<vmem>>, vector<1x8x128xf32>
    %25 = vector.shape_cast %24 : vector<1x8x128xf32> to vector<8x128xf32>
    %26 = vector.shape_cast %23 : vector<8x128xf32> to vector<1x8x128xf32>
    tpu.vector_store %arg5[%c0_14, %c0_15, %c0_16], %26 {strides = array<i32>} : memref<1x8x128xf32, #tpu.memory_space<vmem>>, vector<1x8x128xf32>,
    return
  }
  func.func @transform_0(%arg0: i32, %arg1: i32) -> i32 {
    %c0_i32 = arith.constant 0 : i32
    %c0_i32_0 = arith.constant 0 : i32
    return %c0_i32 : i32
  }
  func.func @transform_1(%arg0: i32, %arg1: i32) -> i32 {
    %c0_i32 = arith.constant 0 : i32
    %c0_i32_0 = arith.constant 0 : i32
    return %c0_i32 : i32
  }
  func.func @transform_2(%arg0: i32, %arg1: i32) -> (i32, i32, i32, i32) {
    %c0_i32 = arith.constant 0 : i32
    %c0_i32_0 = arith.constant 0 : i32
    %c0_i32_1 = arith.constant 0 : i32
    return %arg0, %c0_i32, %arg1, %c0_i32_0 : i32, i32, i32, i32
  }
  func.func @transform_3(%arg0: i32, %arg1: i32) -> (i32, i32, i32) {
    %c0_i32 = arith.constant 0 : i32
    %c0_i32_0 = arith.constant 0 : i32
    return %arg0, %arg1, %c0_i32 : i32, i32, i32
  }
}

</mosaic_0001>

<llo_original>
// kernel: model_forward.1
$region0: #{model_forward.1}
  #allocation0 [shape = 'u32[]', space=smem, size = 0x4, offset = 0x4, fixed_abs, tag = 'smem constant byte address 0x4 - core index']
  #allocation1 [shape = 'u32[144,128]{1,0:T(1,128)}', space=vmem, size = 0x12000, scoped, tag = 'internal scratch']
  #allocation2 [shape = 'f32[1]{0:T(128)S(6)}', space=smem, size = 0x200, scoped, tag = 'scoped memory for model_forward.1']
  %s0 = inlined_call_operand.vmem [shape: f32[3], index: 0, kind: input, shape index: {}]
  %s1 = inlined_call_operand.<no memory space> [shape: f32[1], index: 1, kind: input, shape index: {}]
  %s2 = inlined_call_operand.vmem [shape: f32[1,3,8,128], index: 2, kind: input, shape index: {}]
  %s3 = inlined_call_operand.vmem [shape: f32[1,8,128], index: 3, kind: output, shape index: {}]
  %s4 = sld [smem:[#allocation0]]
  $region26: #{model_forward.1} parent=0
    _
  %s6 = ssub.s32 1, %s4
  %s7 = scalar_select 0, %s6, %s4
  %8 = sst [smem:[#allocation2]] %s1
  $region1: #{model_forward.1} parent=0
    #allocation3 [shape = 'u8[512]{0}', space=smem, size = 0x200, scoped, tag = 'input window, operand 0, single buffered']
    #allocation4 [shape = 's32[1]{0}', space=sflag, size = 0x4, scoped, tag = 'scoped memory for model_forward.1']
    %9 = vsyncpa [#allocation4], 0
    // Predicated region
    $region2: #{model_forward.1} parent=1 // pred_check
      _
    $region3: #{model_forward.1} parent=1 // pred_check_branch
      %11 = sbr.rel (0) target = $region5
    $region4: #{model_forward.1} parent=1 // pred_region
      %s13 = ssub.s32 16, 16
      %14 = vsyncadd [#allocation4], %s13
      %s16 = sshll.u32 %s0, 4
      %s17 = int_to_ptr.vmem [resolvable:$true] %s16
      %19 = dma.vmem_to_smem %s17, 16, [#allocation3], [#allocation4]
    $region5: #{model_forward.1} parent=1 // pred_fallthru
      _
    // Predicated region
    $region6: #{model_forward.1} parent=1 // pred_check
      _
    $region7: #{model_forward.1} parent=1 // pred_check_branch
      %21 = sbr.rel (0) target = $region9
    $region8: #{model_forward.1} parent=1 // pred_region
      _
    $region9: #{model_forward.1} parent=1 // pred_fallthru
      _
    // Predicated region
    $region10: #{model_forward.1} parent=1 // pred_check
      _
    $region11: #{model_forward.1} parent=1 // pred_check_branch
      %23 = sbr.rel (0) target = $region13
    $region12: #{model_forward.1} parent=1 // pred_region
      _
    $region13: #{model_forward.1} parent=1 // pred_fallthru
      _
    // Predicated region
    $region14: #{model_forward.1} parent=1 // pred_check
      _
    $region15: #{model_forward.1} parent=1 // pred_check_branch
      %25 = sbr.rel (0) target = $region17
    $region16: #{model_forward.1} parent=1 // pred_region
      %26 = dma.done [#allocation4], 16
    $region17: #{model_forward.1} parent=1 // pred_fallthru
      _
    %27 = sfence
    %v28 = vld [vmem:[%s2] sm:$0xff]
    %s29 = sld [smem:[#allocation3]]
    %v30 = vstv %s29
    %v31 = vmul.f32 %v28, %v30
    %s32 = sld [smem:[#allocation2]]
    %v33 = vstv %s32
    %v34 = vadd.f32 %v31, %v33
    %s35 = scalar_lea.vmem %s2, 8
    %v36 = vld [vmem:[%s35] sm:$0xff]
    %s37 = sld [smem:[#allocation3 + $0x1]]
    %v38 = vstv %s37
    %v39 = vmul.f32 %v36, %v38
    %v40 = vadd.f32 %v34, %v39
    %s41 = scalar_lea.vmem %s2, 16
    %v42 = vld [vmem:[%s41] sm:$0xff]
    %s43 = sld [smem:[#allocation3 + $0x2]]
    %v44 = vstv %s43
    %v45 = vmul.f32 %v42, %v44
    %v46 = vadd.f32 %v40, %v45
    %v47 = vmax.f32 %v46, 1.144
    %v48 = vmin.f32 %v47, 1.145
    %49 = vst [vmem:[%s3] sm:$0xff] %v48
    // Predicated region
    $region18: #{model_forward.1} parent=1 // pred_check
      _
    $region19: #{model_forward.1} parent=1 // pred_check_branch
      %51 = sbr.rel (0) target = $region21
    $region20: #{model_forward.1} parent=1 // pred_region
      _
    $region21: #{model_forward.1} parent=1 // pred_fallthru
      _
    // Predicated region
    $region22: #{model_forward.1} parent=1 // pred_check
      _
    $region23: #{model_forward.1} parent=1 // pred_check_branch
      %53 = sbr.rel (0) target = $region25
    $region24: #{model_forward.1} parent=1 // pred_region
      _
    $region25: #{model_forward.1} parent=1 // pred_fallthru
      _
    %54 = vsyncpa [#allocation4], 1

</llo_original>
